<compile_context>
chip_gen: v6e
topology: v6e:2x2x1
jax: 0.10.0
libtpu: 0.0.40
codegen_flags: <defaults>
</compile_context>

<pallas_src>
import functools

import jax
import jax.numpy as jnp
from jax.experimental import pallas as pl
from jax.experimental.pallas import tpu as pltpu

NUM_STATE = 2
NUM_ACTION = 4
H1 = 16
H2 = 8

# Per-step VMEM in the natural layout is ~2-5 KB per batch row (inputs/outputs
# are lane-padded to 128); 4096 rows keeps a step comfortably under the 32 MiB
# v7x scoped budget.  Sweep higher on v5e/v6e via the block_b argument.
_MAX_BLOCK_B = 4096
_VMEM_LIMIT_BYTES = 48 * 1024 * 1024


def _round_up(x, m):
    return ((x + m - 1) // m) * m


def _pick_block_b(batch, max_block=_MAX_BLOCK_B):
    """Largest tile (multiple of 8) that still gives >= 2 grid steps whenever
    the batch allows it (keeps both v7x TensorCores busy), capped for VMEM."""
    if batch <= 8:
        return 8
    half = _round_up((batch + 1) // 2, 8)
    return max(8, min(max_block, half))


def _actor_kernel(x_ref, w1_ref, b1_ref, w2_ref, b2_ref, w3_ref, b3_ref,
                  out_ref):
    """Fused MLP + softmax, everything in the natural (batch, feature) layout.

    x_ref:   (B_TILE, NUM_STATE)
    w*_ref:  (in, out)            weights pre-transposed once in the wrapper
    b*_ref:  (1, out)
    out_ref: (B_TILE, NUM_ACTION) softmax probabilities
    """
    x = x_ref[...]                                            # (Bt, 2)

    # fc1 + ReLU
    h1 = jnp.dot(x, w1_ref[...], preferred_element_type=jnp.float32)
    h1 = jnp.maximum(h1 + b1_ref[...], 0.0)                   # (Bt, 16)

    # fc2 + ReLU
    h2 = jnp.dot(h1, w2_ref[...], preferred_element_type=jnp.float32)
    h2 = jnp.maximum(h2 + b2_ref[...], 0.0)                   # (Bt, 8)

    # action head
    logits = jnp.dot(h2, w3_ref[...], preferred_element_type=jnp.float32)
    logits = logits + b3_ref[...]                             # (Bt, 4)

    # Numerically stable softmax over the feature axis (last dim). All
    # reductions are strictly per-row, so garbage in masked tail rows cannot
    # leak into valid rows.
    m = jnp.max(logits, axis=-1, keepdims=True)               # (Bt, 1)
    e = jnp.exp(logits - m)
    denom = jnp.sum(e, axis=-1, keepdims=True)                # (Bt, 1)
    # approx=False is the exact divide; approx=True (EUP vrcp) is a free slot
    # shift but would require renormalizing / relaxing the sum-to-1 tolerance.
    out_ref[...] = e * pl.reciprocal(denom, approx=False)


@functools.partial(jax.jit, static_argnames=("block_b",))
def actor_forward_pallas(x, w1, b1, w2, b2, w3, b3, *, block_b=None):
    """Pallas forward pass. x: (B, NUM_STATE) float32 -> (B, NUM_ACTION)."""
    B = x.shape[0]
    if block_b is None:
        block_b = _pick_block_b(B)
    block_b = max(8, _round_up(int(block_b), 8))
    n_blocks = pl.cdiv(B, block_b)

    x = x.astype(jnp.float32)
    # Parameter-only relayout (a few hundred bytes, fused under jit):
    # PyTorch (out, in) -> (in, out); biases -> (1, out).
    w1t = w1.T.astype(jnp.float32)
    w2t = w2.T.astype(jnp.float32)
    w3t = w3.T.astype(jnp.float32)
    b1r = jnp.reshape(b1, (1, H1)).astype(jnp.float32)
    b2r = jnp.reshape(b2, (1, H2)).astype(jnp.float32)
    b3r = jnp.reshape(b3, (1, NUM_ACTION)).astype(jnp.float32)

    return pl.pallas_call(
        _actor_kernel,
        out_shape=jax.ShapeDtypeStruct((B, NUM_ACTION), jnp.float32),
        grid=(n_blocks,),
        in_specs=[
            pl.BlockSpec((block_b, NUM_STATE), lambda i: (i, 0)),   # x tile
            pl.BlockSpec((NUM_STATE, H1), lambda i: (0, 0)),        # w1^T (resident)
            pl.BlockSpec((1, H1), lambda i: (0, 0)),                # b1
            pl.BlockSpec((H1, H2), lambda i: (0, 0)),               # w2^T
            pl.BlockSpec((1, H2), lambda i: (0, 0)),                # b2
            pl.BlockSpec((H2, NUM_ACTION), lambda i: (0, 0)),       # w3^T
            pl.BlockSpec((1, NUM_ACTION), lambda i: (0, 0)),        # b3
        ],
        out_specs=pl.BlockSpec((block_b, NUM_ACTION), lambda i: (i, 0)),
        compiler_params=pltpu.CompilerParams(
            dimension_semantics=("parallel",),
            vmem_limit_bytes=_VMEM_LIMIT_BYTES),
    )(x, w1t, b1r, w2t, b2r, w3t, b3r)


def reference_forward(x, w1, b1, w2, b2, w3, b3):
    """Pure-JAX reference (identical math, PyTorch weight convention)."""
    h1 = jnp.maximum(x @ w1.T + b1, 0.0)
    h2 = jnp.maximum(h1 @ w2.T + b2, 0.0)
    logits = h2 @ w3.T + b3
    return jax.nn.softmax(logits, axis=1)


def actor_forward(x, w1, b1, w2, b2, w3, b3, *, block_b=None,
                  min_pallas_batch=8192):
    """Dispatcher: tiny batches (the typical PPO minibatch of 32) are pure
    dispatch overhead in Pallas, so they use the fused XLA path; large rollout
    batches go through the kernel.  The crossover should be re-measured with
    xprof (min of >=3 runs) after these layout changes."""
    if x.shape[0] < min_pallas_batch:
        return reference_forward(x, w1, b1, w2, b2, w3, b3)
    return actor_forward_pallas(x, w1, b1, w2, b2, w3, b3, block_b=block_b)


def init_params(key):
    """Mimic PyTorch's default Linear init: U(-1/sqrt(fan_in), 1/sqrt(fan_in)).
    Weights stored (out, in), biases (out,) -- the nn.Linear layout."""
    def linear(key, fan_in, fan_out):
        kw, kb = jax.random.split(key)
        bound = 1.0 / jnp.sqrt(float(fan_in))
        w = jax.random.uniform(kw, (fan_out, fan_in), jnp.float32,
                               minval=-bound, maxval=bound)
        b = jax.random.uniform(kb, (fan_out,), jnp.float32,
                               minval=-bound, maxval=bound)
        return w, b

    k1, k2, k3 = jax.random.split(key, 3)
    w1, b1 = linear(k1, NUM_STATE, H1)
    w2, b2 = linear(k2, H1, H2)
    w3, b3 = linear(k3, H2, NUM_ACTION)
    return w1, b1, w2, b2, w3, b3


if __name__ == "__main__":
    key = jax.random.PRNGKey(0)
    k_params, k_x1, k_x2 = jax.random.split(key, 3)
    params = init_params(k_params)

    # --- Small-batch smoke test: single tile, no wrapper pad/transpose.
    B_small = 8
    x_small = jax.random.normal(k_x1, (B_small, NUM_STATE), jnp.float32)
    out_small = jax.block_until_ready(actor_forward_pallas(x_small, *params))
    ref_small = reference_forward(x_small, *params)
    assert out_small.shape == (B_small, NUM_ACTION)
    assert jnp.allclose(jnp.sum(out_small, axis=1), 1.0, atol=1e-5)
    assert jnp.allclose(out_small, ref_small, atol=1e-5, rtol=1e-5)

    # --- Ragged batch: adaptive tile -> 2 grid steps (952 rows each) with a
    #     masked tail block (rows 1900..1903 dropped on writeback).
    B_big = 1900
    x_big = jax.random.normal(k_x2, (B_big, NUM_STATE), jnp.float32)
    out_big = jax.block_until_ready(actor_forward_pallas(x_big, *params))
    ref_big = reference_forward(x_big, *params)
    assert out_big.shape == (B_big, NUM_ACTION)
    assert jnp.allclose(jnp.sum(out_big, axis=1), 1.0, atol=1e-5)
    assert jnp.allclose(out_big, ref_big, atol=1e-5, rtol=1e-5)

    # --- Dispatcher guard: tiny batch routes to the fused XLA path.
    out_tiny = jax.block_until_ready(actor_forward(x_small, *params))
    assert jnp.allclose(out_tiny, ref_small, atol=1e-5, rtol=1e-5)

    print("KERNEL_OK")
</pallas_src>

<mosaic_0001>
module attributes {stable_mosaic.version = 11 : i64} {
  func.func @_actor_kernel(%arg0: i32, %arg1: memref<8x2xf32, #tpu.memory_space<vmem>>, %arg2: memref<2x16xf32, #tpu.memory_space<vmem>>, %arg3: memref<1x16xf32, #tpu.memory_space<vmem>>, %arg4: memref<16x8xf32, #tpu.memory_space<vmem>>, %arg5: memref<1x8xf32, #tpu.memory_space<vmem>>, %arg6: memref<8x4xf32, #tpu.memory_space<vmem>>, %arg7: memref<1x4xf32, #tpu.memory_space<vmem>>, %arg8: memref<8x4xf32, #tpu.memory_space<vmem>>) attributes {dimension_semantics = [#tpu.dimension_semantics<parallel>], iteration_bounds = array<i64: 1>, scalar_prefetch = 0 : i64, scratch_operands = 0 : i64, tpu.core_type = #tpu.core_type<tc>, window_params = [{transform_indices = @transform_0, window_bounds = array<i64: 8, 2>}, {pipeline_mode = #tpu.pipeline_mode<synchronous>, transform_indices = @transform_1, window_bounds = array<i64: 2, 16>}, {pipeline_mode = #tpu.pipeline_mode<synchronous>, transform_indices = @transform_2, window_bounds = array<i64: 1, 16>}, {pipeline_mode = #tpu.pipeline_mode<synchronous>, transform_indices = @transform_3, window_bounds = array<i64: 16, 8>}, {pipeline_mode = #tpu.pipeline_mode<synchronous>, transform_indices = @transform_4, window_bounds = array<i64: 1, 8>}, {pipeline_mode = #tpu.pipeline_mode<synchronous>, transform_indices = @transform_5, window_bounds = array<i64: 8, 4>}, {pipeline_mode = #tpu.pipeline_mode<synchronous>, transform_indices = @transform_6, window_bounds = array<i64: 1, 4>}, {transform_indices = @transform_7, window_bounds = array<i64: 8, 4>}]} {
    %c0 = arith.constant 0 : index
    %c0_0 = arith.constant 0 : index
    %0 = vector.load %arg1[%c0, %c0_0] : memref<8x2xf32, #tpu.memory_space<vmem>>, vector<8x2xf32>
    %c0_1 = arith.constant 0 : index
    %c0_2 = arith.constant 0 : index
    %1 = vector.load %arg2[%c0_1, %c0_2] : memref<2x16xf32, #tpu.memory_space<vmem>>, vector<2x16xf32>
    %cst = arith.constant dense<0.000000e+00> : vector<8x16xf32>
    %2 = tpu.matmul %0, %1, %cst {dimension_numbers = #tpu.dot_dimension_numbers<[1], [0], [0], [1], [0, 0, 1, 1], [], []>} : vector<8x2xf32>, vector<2x16xf32>, vector<8x16xf32> -> vector<8x16xf32>
    %c0_3 = arith.constant 0 : index
    %c0_4 = arith.constant 0 : index
    %3 = vector.load %arg3[%c0_3, %c0_4] : memref<1x16xf32, #tpu.memory_space<vmem>>, vector<1x16xf32>
    %4 = vector.broadcast %3 : vector<1x16xf32> to vector<8x16xf32>
    %5 = arith.addf %2, %4 : vector<8x16xf32>
    %cst_5 = arith.constant 0.000000e+00 : f32
    %6 = vector.broadcast %cst_5 : f32 to vector<8x16xf32>
    %7 = arith.maximumf %5, %6 : vector<8x16xf32>
    %c0_6 = arith.constant 0 : index
    %c0_7 = arith.constant 0 : index
    %8 = vector.load %arg4[%c0_6, %c0_7] : memref<16x8xf32, #tpu.memory_space<vmem>>, vector<16x8xf32>
    %cst_8 = arith.constant dense<0.000000e+00> : vector<8x8xf32>
    %9 = tpu.matmul %7, %8, %cst_8 {dimension_numbers = #tpu.dot_dimension_numbers<[1], [0], [0], [1], [0, 0, 1, 1], [], []>} : vector<8x16xf32>, vector<16x8xf32>, vector<8x8xf32> -> vector<8x8xf32>
    %c0_9 = arith.constant 0 : index
    %c0_10 = arith.constant 0 : index
    %10 = vector.load %arg5[%c0_9, %c0_10] : memref<1x8xf32, #tpu.memory_space<vmem>>, vector<1x8xf32>
    %11 = vector.broadcast %10 : vector<1x8xf32> to vector<8x8xf32>
    %12 = arith.addf %9, %11 : vector<8x8xf32>
    %cst_11 = arith.constant 0.000000e+00 : f32
    %13 = vector.broadcast %cst_11 : f32 to vector<8x8xf32>
    %14 = arith.maximumf %12, %13 : vector<8x8xf32>
    %c0_12 = arith.constant 0 : index
    %c0_13 = arith.constant 0 : index
    %15 = vector.load %arg6[%c0_12, %c0_13] : memref<8x4xf32, #tpu.memory_space<vmem>>, vector<8x4xf32>
    %cst_14 = arith.constant dense<0.000000e+00> : vector<8x4xf32>
    %16 = tpu.matmul %14, %15, %cst_14 {dimension_numbers = #tpu.dot_dimension_numbers<[1], [0], [0], [1], [0, 0, 1, 1], [], []>} : vector<8x8xf32>, vector<8x4xf32>, vector<8x4xf32> -> vector<8x4xf32>
    %c0_15 = arith.constant 0 : index
    %c0_16 = arith.constant 0 : index
    %17 = vector.load %arg7[%c0_15, %c0_16] : memref<1x4xf32, #tpu.memory_space<vmem>>, vector<1x4xf32>
    %18 = vector.broadcast %17 : vector<1x4xf32> to vector<8x4xf32>
    %19 = arith.addf %16, %18 : vector<8x4xf32>
    %cst_17 = arith.constant dense<0xFF800000> : vector<8xf32>
    %20 = vector.multi_reduction <maximumf>, %19, %cst_17 [1] : vector<8x4xf32> to vector<8xf32>
    %21 = vector.shape_cast %20 : vector<8xf32> to vector<8x1xf32>
    %22 = vector.broadcast %21 : vector<8x1xf32> to vector<8x4xf32>
    %23 = arith.subf %19, %22 : vector<8x4xf32>
    %24 = math.exp %23 : vector<8x4xf32>
    %cst_18 = arith.constant dense<0.000000e+00> : vector<8xf32>
    %25 = vector.multi_reduction <add>, %24, %cst_18 [1] : vector<8x4xf32> to vector<8xf32>
    %26 = vector.shape_cast %25 : vector<8xf32> to vector<8x1xf32>
    %27 = tpu.reciprocal %26 : vector<8x1xf32> -> vector<8x1xf32>
    %28 = vector.broadcast %27 : vector<8x1xf32> to vector<8x4xf32>
    %29 = arith.mulf %24, %28 : vector<8x4xf32>
    %c0_19 = arith.constant 0 : index
    %c0_20 = arith.constant 0 : index
    %30 = vector.load %arg8[%c0_19, %c0_20] : memref<8x4xf32, #tpu.memory_space<vmem>>, vector<8x4xf32>
    tpu.vector_store %arg8[%c0_19, %c0_20], %29 {strides = array<i32>} : memref<8x4xf32, #tpu.memory_space<vmem>>, vector<8x4xf32>,
    return
  }
  func.func @transform_0(%arg0: i32) -> (i32, i32) {
    %c0_i32 = arith.constant 0 : i32
    %c0_i32_0 = arith.constant 0 : i32
    return %arg0, %c0_i32 : i32, i32
  }
  func.func @transform_1(%arg0: i32) -> (i32, i32) {
    %c0_i32 = arith.constant 0 : i32
    %c0_i32_0 = arith.constant 0 : i32
    %c0_i32_1 = arith.constant 0 : i32
    return %c0_i32, %c0_i32_0 : i32, i32
  }
  func.func @transform_2(%arg0: i32) -> (i32, i32) {
    %c0_i32 = arith.constant 0 : i32
    %c0_i32_0 = arith.constant 0 : i32
    %c0_i32_1 = arith.constant 0 : i32
    return %c0_i32, %c0_i32_0 : i32, i32
  }
  func.func @transform_3(%arg0: i32) -> (i32, i32) {
    %c0_i32 = arith.constant 0 : i32
    %c0_i32_0 = arith.constant 0 : i32
    %c0_i32_1 = arith.constant 0 : i32
    return %c0_i32, %c0_i32_0 : i32, i32
  }
  func.func @transform_4(%arg0: i32) -> (i32, i32) {
    %c0_i32 = arith.constant 0 : i32
    %c0_i32_0 = arith.constant 0 : i32
    %c0_i32_1 = arith.constant 0 : i32
    return %c0_i32, %c0_i32_0 : i32, i32
  }
  func.func @transform_5(%arg0: i32) -> (i32, i32) {
    %c0_i32 = arith.constant 0 : i32
    %c0_i32_0 = arith.constant 0 : i32
    %c0_i32_1 = arith.constant 0 : i32
    return %c0_i32, %c0_i32_0 : i32, i32
  }
  func.func @transform_6(%arg0: i32) -> (i32, i32) {
    %c0_i32 = arith.constant 0 : i32
    %c0_i32_0 = arith.constant 0 : i32
    %c0_i32_1 = arith.constant 0 : i32
    return %c0_i32, %c0_i32_0 : i32, i32
  }
  func.func @transform_7(%arg0: i32) -> (i32, i32) {
    %c0_i32 = arith.constant 0 : i32
    %c0_i32_0 = arith.constant 0 : i32
    return %arg0, %c0_i32 : i32, i32
  }
}

</mosaic_0001>

<llo_original>
// kernel: actor_forward_pallas.1
$region0: #{actor_forward_pallas.1}
  #allocation0 [shape = 'u32[]', space=smem, size = 0x4, offset = 0x4, fixed_abs, tag = 'smem constant byte address 0x4 - core index']
  #allocation1 [shape = 'u32[144,128]{1,0:T(1,128)}', space=vmem, size = 0x12000, scoped, tag = 'internal scratch']
  %s0 = inlined_call_operand.vmem [shape: f32[8,2], index: 0, kind: input, shape index: {}]
  %s1 = inlined_call_operand.vmem [shape: f32[2,16], index: 1, kind: input, shape index: {}]
  %s2 = inlined_call_operand.vmem [shape: f32[1,16], index: 2, kind: input, shape index: {}]
  %s3 = inlined_call_operand.vmem [shape: f32[16,8], index: 3, kind: input, shape index: {}]
  %s4 = inlined_call_operand.vmem [shape: f32[1,8], index: 4, kind: input, shape index: {}]
  %s5 = inlined_call_operand.vmem [shape: f32[8,4], index: 5, kind: input, shape index: {}]
  %s6 = inlined_call_operand.vmem [shape: f32[1,4], index: 6, kind: input, shape index: {}]
  %s7 = inlined_call_operand.vmem [shape: f32[8,4], index: 7, kind: output, shape index: {}]
  %s8 = sld [smem:[#allocation0]]
  $region38: #{actor_forward_pallas.1} parent=0
    _
  %s10 = ssub.s32 1, %s8
  %s11 = scalar_select 0, %s10, %s8
  // Predicated region
  $region2: #{actor_forward_pallas.1} parent=0 // pred_check
    _
  $region3: #{actor_forward_pallas.1} parent=0 // pred_check_branch
    %13 = sbr.rel (0) target = $region5
  $region4: #{actor_forward_pallas.1} parent=0 // pred_region
    _
  $region5: #{actor_forward_pallas.1} parent=0 // pred_fallthru
    _
  // Predicated region
  $region6: #{actor_forward_pallas.1} parent=0 // pred_check
    _
  $region7: #{actor_forward_pallas.1} parent=0 // pred_check_branch
    %15 = sbr.rel (0) target = $region9
  $region8: #{actor_forward_pallas.1} parent=0 // pred_region
    _
  $region9: #{actor_forward_pallas.1} parent=0 // pred_fallthru
    _
  // Predicated region
  $region10: #{actor_forward_pallas.1} parent=0 // pred_check
    _
  $region11: #{actor_forward_pallas.1} parent=0 // pred_check_branch
    %17 = sbr.rel (0) target = $region13
  $region12: #{actor_forward_pallas.1} parent=0 // pred_region
    _
  $region13: #{actor_forward_pallas.1} parent=0 // pred_fallthru
    _
  // Predicated region
  $region14: #{actor_forward_pallas.1} parent=0 // pred_check
    _
  $region15: #{actor_forward_pallas.1} parent=0 // pred_check_branch
    %19 = sbr.rel (0) target = $region17
  $region16: #{actor_forward_pallas.1} parent=0 // pred_region
    _
  $region17: #{actor_forward_pallas.1} parent=0 // pred_fallthru
    _
  // Predicated region
  $region18: #{actor_forward_pallas.1} parent=0 // pred_check
    _
  $region19: #{actor_forward_pallas.1} parent=0 // pred_check_branch
    %21 = sbr.rel (0) target = $region21
  $region20: #{actor_forward_pallas.1} parent=0 // pred_region
    _
  $region21: #{actor_forward_pallas.1} parent=0 // pred_fallthru
    _
  // Predicated region
  $region22: #{actor_forward_pallas.1} parent=0 // pred_check
    _
  $region23: #{actor_forward_pallas.1} parent=0 // pred_check_branch
    %23 = sbr.rel (0) target = $region25
  $region24: #{actor_forward_pallas.1} parent=0 // pred_region
    _
  $region25: #{actor_forward_pallas.1} parent=0 // pred_fallthru
    _
  // Predicated region
  $region26: #{actor_forward_pallas.1} parent=0 // pred_check
    _
  $region27: #{actor_forward_pallas.1} parent=0 // pred_check_branch
    %25 = sbr.rel (0) target = $region29
  $region28: #{actor_forward_pallas.1} parent=0 // pred_region
    _
  $region29: #{actor_forward_pallas.1} parent=0 // pred_fallthru
    _
  %v26 = vld [vmem:[%s0] sm:$0xff]
  %v27 = vld [vmem:[%s1] sm:$0x3]
  %v28 = vld [vmem:[%s2] sm:$0x1]
  %v30 = vlaneseq
  %v31 = vshrl.u32 %v30, 7
  %v32 = vsub.s32 0, %v31
  %v33 = vrot.slane %v28, %v32
  %vm35 = vcmask 15360
  %v37 = vsel %vm35, %v26, 0
  %vm39 = vcmask 1041408
  %v41 = vsel %vm39, %v27, 0
  %43 = vmatprep.subr.mxu0 0.0
  %44 = vmatpush1.msra.mxu0 0.0
  %45 = vmatprep.subr.mxu0 0.0
  %46 = vmatpush1.msra.mxu0 0.0
  %47 = vmatprep.subr.mxu0 0.0
  %48 = vmatpush1.msra.mxu0 0.0
  %49 = vmatprep.subr.mxu0 0.0
  %50 = vmatpush1.msra.mxu0 0.0
  %51 = vmatprep.subr.mxu0 0.0
  %52 = vmatpush1.msra.mxu0 0.0
  %53 = vmatprep.subr.mxu0 0.0
  %54 = vmatpush1.msra.mxu0 0.0
  %55 = vmatprep.subr.mxu0 0.0
  %56 = vmatpush1.msra.mxu0 0.0
  %57 = vmatprep.subr.mxu0 0.0
  %58 = vmatpush1.msra.mxu0 0.0
  %59 = vmatprep.subr.mxu0 0.0
  %60 = vmatpush1.msra.mxu0 0.0
  %61 = vmatprep.subr.mxu0 0.0
  %62 = vmatpush1.msra.mxu0 0.0
  %63 = vmatprep.subr.mxu0 0.0
  %64 = vmatpush1.msra.mxu0 0.0
  %65 = vmatprep.subr.mxu0 0.0
  %66 = vmatpush1.msra.mxu0 0.0
  %67 = vmatprep.subr.mxu0 0.0
  %68 = vmatpush1.msra.mxu0 0.0
  %69 = vmatprep.subr.mxu0 0.0
  %70 = vmatpush1.msra.mxu0 0.0
  %71 = vmatprep.subr.mxu0 0.0
  %72 = vmatpush1.msra.mxu0 0.0
  %73 = vmatprep.subr.mxu0 0.0
  %74 = vmatpush1.msra.mxu0 %v41
  %75 = vmatprep.subr.mxu0 0.0
  %76 = vmatpush2.msra.mxu0 0.0
  %77 = vmatprep.subr.mxu0 0.0
  %78 = vmatpush2.msra.mxu0 0.0
  %79 = vmatprep.subr.mxu0 0.0
  %80 = vmatpush2.msra.mxu0 0.0
  %81 = vmatprep.subr.mxu0 0.0
  %82 = vmatpush2.msra.mxu0 0.0
  %83 = vmatprep.subr.mxu0 0.0
  %84 = vmatpush2.msra.mxu0 0.0
  %85 = vmatprep.subr.mxu0 0.0
  %86 = vmatpush2.msra.mxu0 0.0
  %87 = vmatprep.subr.mxu0 0.0
  %88 = vmatpush2.msra.mxu0 0.0
  %89 = vmatprep.subr.mxu0 0.0
  %90 = vmatpush2.msra.mxu0 0.0
  %91 = vmatprep.subr.mxu0 0.0
  %92 = vmatpush2.msra.mxu0 0.0
  %93 = vmatprep.subr.mxu0 0.0
  %94 = vmatpush2.msra.mxu0 0.0
  %95 = vmatprep.subr.mxu0 0.0
  %96 = vmatpush2.msra.mxu0 0.0
  %97 = vmatprep.subr.mxu0 0.0
  %98 = vmatpush2.msra.mxu0 0.0
  %99 = vmatprep.subr.mxu0 0.0
  %100 = vmatpush2.msra.mxu0 0.0
  %101 = vmatprep.subr.mxu0 0.0
  %102 = vmatpush2.msra.mxu0 0.0
  %103 = vmatprep.subr.mxu0 0.0
  %104 = vmatpush2.msra.mxu0 0.0
  %105 = vmatprep.subr.mxu0 0.0
  %106 = vmatpush2.msra.mxu0 0.0
  %107 = vmatprep.mubr.f32.mxu0 0.0
  %108 = vmatmul.mubr.f32.gmra.mxu0 %v37
  %v109 = vpop.f32.mrf.mxu0
  %v110 = vadd.f32 %v33, %v109
  %v111 = vpop.f32.mrf.mxu0
  %112 = vdwg.mxu0
  %v113 = vmax.f32 %v110, 0.0
  %v114 = vld [vmem:[%s3] sm:$0xff]
  %v115 = vld [vmem:[%s3 + $0x8] sm:$0xff]
  %v116 = vld [vmem:[%s4] sm:$0x1]
  %v118 = vlaneseq
  %v119 = vshrl.u32 %v118, 7
  %v120 = vsub.s32 0, %v119
  %v121 = vrot.slane %v116, %v120
  %vm123 = vcmask 130048
  %v125 = vsel %vm123, %v113, 0
  %127 = vmatprep.subr.mxu0 0.0
  %128 = vmatpush1.msra.mxu0 0.0
  %129 = vmatprep.subr.mxu0 0.0
  %130 = vmatpush1.msra.mxu0 0.0
  %131 = vmatprep.subr.mxu0 0.0
  %132 = vmatpush1.msra.mxu0 0.0
  %133 = vmatprep.subr.mxu0 0.0
  %134 = vmatpush1.msra.mxu0 0.0
  %135 = vmatprep.subr.mxu0 0.0
  %136 = vmatpush1.msra.mxu0 0.0
  %137 = vmatprep.subr.mxu0 0.0
  %138 = vmatpush1.msra.mxu0 0.0
  %139 = vmatprep.subr.mxu0 0.0
  %140 = vmatpush1.msra.mxu0 0.0
  %141 = vmatprep.subr.mxu0 0.0
  %142 = vmatpush1.msra.mxu0 0.0
  %143 = vmatprep.subr.mxu0 0.0
  %144 = vmatpush1.msra.mxu0 0.0
  %145 = vmatprep.subr.mxu0 0.0
  %146 = vmatpush1.msra.mxu0 0.0
  %147 = vmatprep.subr.mxu0 0.0
  %148 = vmatpush1.msra.mxu0 0.0
  %149 = vmatprep.subr.mxu0 0.0
  %150 = vmatpush1.msra.mxu0 0.0
  %151 = vmatprep.subr.mxu0 0.0
  %152 = vmatpush1.msra.mxu0 0.0
  %153 = vmatprep.subr.mxu0 0.0
  %154 = vmatpush1.msra.mxu0 0.0
  %155 = vmatprep.subr.mxu0 0.0
  %156 = vmatpush1.msra.mxu0 %v115
  %157 = vmatprep.subr.mxu0 0.0
  %158 = vmatpush1.msra.mxu0 %v114
  %159 = vmatprep.subr.mxu0 0.0
  %160 = vmatpush2.msra.mxu0 0.0
  %161 = vmatprep.subr.mxu0 0.0
  %162 = vmatpush2.msra.mxu0 0.0
  %163 = vmatprep.subr.mxu0 0.0
  %164 = vmatpush2.msra.mxu0 0.0
  %165 = vmatprep.subr.mxu0 0.0
  %166 = vmatpush2.msra.mxu0 0.0
  %167 = vmatprep.subr.mxu0 0.0
  %168 = vmatpush2.msra.mxu0 0.0
  %169 = vmatprep.subr.mxu0 0.0
  %170 = vmatpush2.msra.mxu0 0.0
  %171 = vmatprep.subr.mxu0 0.0
  %172 = vmatpush2.msra.mxu0 0.0
  %173 = vmatprep.subr.mxu0 0.0
  %174 = vmatpush2.msra.mxu0 0.0
  %175 = vmatprep.subr.mxu0 0.0
  %176 = vmatpush2.msra.mxu0 0.0
  %177 = vmatprep.subr.mxu0 0.0
  %178 = vmatpush2.msra.mxu0 0.0
  %179 = vmatprep.subr.mxu0 0.0
  %180 = vmatpush2.msra.mxu0 0.0
  %181 = vmatprep.subr.mxu0 0.0
  %182 = vmatpush2.msra.mxu0 0.0
  %183 = vmatprep.subr.mxu0 0.0
  %184 = vmatpush2.msra.mxu0 0.0
  %185 = vmatprep.subr.mxu0 0.0
  %186 = vmatpush2.msra.mxu0 0.0
  %187 = vmatprep.subr.mxu0 0.0
  %188 = vmatpush2.msra.mxu0 0.0
  %189 = vmatprep.subr.mxu0 0.0
  %190 = vmatpush2.msra.mxu0 0.0
  %191 = vmatprep.mubr.f32.mxu0 0.0
  %192 = vmatmul.mubr.f32.gmra.mxu0 %v125
  %v193 = vpop.f32.mrf.mxu0
  %v194 = vadd.f32 %v121, %v193
  %v195 = vpop.f32.mrf.mxu0
  %196 = vdwg.mxu0
  %v197 = vmax.f32 %v194, 0.0
  %v198 = vld [vmem:[%s5] sm:$0xff]
  %v199 = vld [vmem:[%s6] sm:$0x1]
  %v201 = vlaneseq
  %v202 = vshrl.u32 %v201, 7
  %v203 = vsub.s32 0, %v202
  %v204 = vrot.slane %v199, %v203
  %vm206 = vcmask 64512
  %v208 = vsel %vm206, %v197, 0
  %210 = vmatprep.subr.mxu0 0.0
  %211 = vmatpush1.msra.mxu0 0.0
  %212 = vmatprep.subr.mxu0 0.0
  %213 = vmatpush1.msra.mxu0 0.0
  %214 = vmatprep.subr.mxu0 0.0
  %215 = vmatpush1.msra.mxu0 0.0
  %216 = vmatprep.subr.mxu0 0.0
  %217 = vmatpush1.msra.mxu0 0.0
  %218 = vmatprep.subr.mxu0 0.0
  %219 = vmatpush1.msra.mxu0 0.0
  %220 = vmatprep.subr.mxu0 0.0
  %221 = vmatpush1.msra.mxu0 0.0
  %222 = vmatprep.subr.mxu0 0.0
  %223 = vmatpush1.msra.mxu0 0.0
  %224 = vmatprep.subr.mxu0 0.0
  %225 = vmatpush1.msra.mxu0 0.0
  %226 = vmatprep.subr.mxu0 0.0
  %227 = vmatpush1.msra.mxu0 0.0
  %228 = vmatprep.subr.mxu0 0.0
  %229 = vmatpush1.msra.mxu0 0.0
  %230 = vmatprep.subr.mxu0 0.0
  %231 = vmatpush1.msra.mxu0 0.0
  %232 = vmatprep.subr.mxu0 0.0
  %233 = vmatpush1.msra.mxu0 0.0
  %234 = vmatprep.subr.mxu0 0.0
  %235 = vmatpush1.msra.mxu0 0.0
  %236 = vmatprep.subr.mxu0 0.0
  %237 = vmatpush1.msra.mxu0 0.0
  %238 = vmatprep.subr.mxu0 0.0
  %239 = vmatpush1.msra.mxu0 0.0
  %240 = vmatprep.subr.mxu0 0.0
  %241 = vmatpush1.msra.mxu0 %v198
  %242 = vmatprep.subr.mxu0 0.0
  %243 = vmatpush2.msra.mxu0 0.0
  %244 = vmatprep.subr.mxu0 0.0
  %245 = vmatpush2.msra.mxu0 0.0
  %246 = vmatprep.subr.mxu0 0.0
  %247 = vmatpush2.msra.mxu0 0.0
  %248 = vmatprep.subr.mxu0 0.0
  %249 = vmatpush2.msra.mxu0 0.0
  %250 = vmatprep.subr.mxu0 0.0
  %251 = vmatpush2.msra.mxu0 0.0
  %252 = vmatprep.subr.mxu0 0.0
  %253 = vmatpush2.msra.mxu0 0.0
  %254 = vmatprep.subr.mxu0 0.0
  %255 = vmatpush2.msra.mxu0 0.0
  %256 = vmatprep.subr.mxu0 0.0
  %257 = vmatpush2.msra.mxu0 0.0
  %258 = vmatprep.subr.mxu0 0.0
  %259 = vmatpush2.msra.mxu0 0.0
  %260 = vmatprep.subr.mxu0 0.0
  %261 = vmatpush2.msra.mxu0 0.0
  %262 = vmatprep.subr.mxu0 0.0
  %263 = vmatpush2.msra.mxu0 0.0
  %264 = vmatprep.subr.mxu0 0.0
  %265 = vmatpush2.msra.mxu0 0.0
  %266 = vmatprep.subr.mxu0 0.0
  %267 = vmatpush2.msra.mxu0 0.0
  %268 = vmatprep.subr.mxu0 0.0
  %269 = vmatpush2.msra.mxu0 0.0
  %270 = vmatprep.subr.mxu0 0.0
  %271 = vmatpush2.msra.mxu0 0.0
  %272 = vmatprep.subr.mxu0 0.0
  %273 = vmatpush2.msra.mxu0 0.0
  %274 = vmatprep.mubr.f32.mxu0 0.0
  %275 = vmatmul.mubr.f32.gmra.mxu0 %v208
  %v276 = vpop.f32.mrf.mxu0
  %v277 = vadd.f32 %v204, %v276
  %v278 = vpop.f32.mrf.mxu0
  %279 = vdwg.mxu0
  %vm280 = vcmask 31744
  %v281 = vsel %vm280, %v277, -inf
  %282 = vmax.xlane.f32.xlu0 %v281
  %v283 = vpop.xlane.xlu0 %282
  %v284 = vsub.f32 %v277, %v283
  %v285 = vmul.f32 %v284, 1.442695
  %v286 = vpow.pop %v285
  %v287 = vsel %vm280, %v286, 0.0
  %288 = vadd.xlane.f32.xlu0 %v287
  %v289 = vpop.xlane.xlu0 %288
  %v290 = vrcp.pop %v289
  %v291 = vmul.f32 %v286, %v290
  %292 = vst.msk [vmem:[%s7] sm:$0xff] %vm280, %v291
  // Predicated region
  $region30: #{actor_forward_pallas.1} parent=0 // pred_check
    _
  $region31: #{actor_forward_pallas.1} parent=0 // pred_check_branch
    %294 = sbr.rel (0) target = $region33
  $region32: #{actor_forward_pallas.1} parent=0 // pred_region
    _
  $region33: #{actor_forward_pallas.1} parent=0 // pred_fallthru
    _
  // Predicated region
  $region34: #{actor_forward_pallas.1} parent=0 // pred_check
    _
  $region35: #{actor_forward_pallas.1} parent=0 // pred_check_branch
    %296 = sbr.rel (0) target = $region37
  $region36: #{actor_forward_pallas.1} parent=0 // pred_region
    _
  $region37: #{actor_forward_pallas.1} parent=0 // pred_fallthru
    _

</llo_original>
